<compile_context>
chip_gen: v7x
topology: tpu7x:2x2x1
jax: 0.10.0
libtpu: 0.0.40
codegen_flags: <defaults>
</compile_context>

<pallas_src>
import functools

import jax
import jax.numpy as jnp
from jax.experimental import pallas as pl
from jax.experimental.pallas import tpu as pltpu


# ---------------------------------------------------------------------------
# Kernels
# ---------------------------------------------------------------------------

def _freqnorm_kernel_3d(x_ref, o_ref, *, eps):
    """Block layout (btile, L, ctile): C on lanes, L on sublanes."""
    x = x_ref[...].astype(jnp.float32)                       # (bt, L, ct)
    x0 = x[:, 0:1, :]                                        # time-step 0
    # Energy of rows 1..L-1 == biased complex variance of FFT(x) (Parseval).
    energy = jnp.sum(x * x, axis=1, keepdims=True) - x0 * x0  # (bt, 1, ct)
    inv_std = jax.lax.rsqrt(energy + eps)
    o_ref[...] = (x * inv_std).astype(o_ref.dtype)
    # Time-step 0 carries exactly the frequency-domain mean -> zero it with a
    # single small row store (no full-block iota/select).
    o_ref[:, 0:1, :] = jnp.zeros(x0.shape, o_ref.dtype)


def _freqnorm_kernel_flat(x_ref, m_red_ref, m_bcast_ref, o_ref, *, eps):
    """Lane-dense path: block (btile, L*C) with L*C on lanes.

    m_red[j, c]   = 1 if (j % C == c and j >= C)   -> per-channel energy (MXU)
    m_bcast[c, i] = 1 if (i % C == c and i >= C)   -> broadcast inv_std back
                                                      (and zeros time-step 0)
    """
    x = x_ref[...].astype(jnp.float32)                       # (bt, L*C)
    energy = jnp.dot(x * x, m_red_ref[...],
                     precision=jax.lax.Precision.HIGHEST,
                     preferred_element_type=jnp.float32)     # (bt, C)
    inv_std = jax.lax.rsqrt(energy + eps)
    scale = jnp.dot(inv_std, m_bcast_ref[...],
                    precision=jax.lax.Precision.HIGHEST,
                    preferred_element_type=jnp.float32)      # (bt, L*C)
    o_ref[...] = (x * scale).astype(o_ref.dtype)             # single dense store


# ---------------------------------------------------------------------------
# Tiling helpers
# ---------------------------------------------------------------------------

def _vmem_budgets():
    """(per-block byte budget, vmem_limit_bytes), generation-aware."""
    cap = None
    try:
        cap = getattr(pltpu.get_tpu_info(), "vmem_capacity_bytes", None)
    except Exception:
        cap = None
    if cap is not None and cap >= (100 << 20):      # v5e / v6e: 128 MiB VMEM
        return 8 << 20, 80 << 20
    # v7x-class (64 MiB / TC) or unknown: stay conservative.
    return 4 << 20, 48 << 20


def _pick_batch_tile(B, row_bytes, budget_bytes, sublane_multiple=1):
    """Largest batch tile that fits the budget; >=2 grid steps when possible."""
    btile = min(B, max(1, budget_bytes // max(row_bytes, 1)))
    if B >= 2:
        # Keep at least 2 grid steps so the "parallel" axis can shard across
        # both v7x TensorCores (no effect on single-TC v5e/v6e).
        btile = min(btile, pl.cdiv(B, 2))
    if sublane_multiple > 1 and btile != B and btile % sublane_multiple:
        # Second-to-last block dim must be a multiple of 8 or the full dim.
        if btile > sublane_multiple:
            btile = (btile // sublane_multiple) * sublane_multiple
        else:
            btile = min(B, sublane_multiple)
    if sublane_multiple > 1 and btile != B and btile % sublane_multiple:
        btile = B
    return int(max(1, min(btile, B)))


def _use_flat_path(B, L, C, budget_bytes):
    if C >= 128:
        return False                                  # already lane-dense enough
    lc = L * C
    if 2 * lc * C * 4 > (4 << 20):                    # selector matrices stay small
        return False
    if min(B, 8) * lc * 4 > budget_bytes:             # need a legal batch tile
        return False
    return True


# ---------------------------------------------------------------------------
# Wrappers
# ---------------------------------------------------------------------------

def _forward_flat(x, eps, budget, vmem_limit):
    B, L, C = x.shape
    LC = L * C
    xf = x.reshape(B, LC)                             # contiguous -> free reshape

    j = jnp.arange(LC)
    c = jnp.arange(C)
    keep = (j >= C)[:, None]                          # drop time-step 0 everywhere
    m_red = (((j[:, None] % C) == c[None, :]) & keep).astype(jnp.float32)  # (LC, C)
    m_bcast = m_red.T                                                       # (C, LC)

    btile = _pick_batch_tile(B, LC * 4, budget, sublane_multiple=8)
    grid = (pl.cdiv(B, btile),)

    out = pl.pallas_call(
        functools.partial(_freqnorm_kernel_flat, eps=eps),
        out_shape=jax.ShapeDtypeStruct((B, LC), x.dtype),
        grid=grid,
        in_specs=[
            pl.BlockSpec((btile, LC), lambda b: (b, 0)),
            pl.BlockSpec((LC, C), lambda b: (0, 0)),
            pl.BlockSpec((C, LC), lambda b: (0, 0)),
        ],
        out_specs=pl.BlockSpec((btile, LC), lambda b: (b, 0)),
        compiler_params=pltpu.CompilerParams(
            dimension_semantics=("parallel",),
            vmem_limit_bytes=vmem_limit,
        ),
    )(xf, m_red, m_bcast)
    return out.reshape(B, L, C)


def _forward_3d(x, eps, budget, vmem_limit):
    B, L, C = x.shape
    # Optional channel tiling (multiples of 128) so huge (L, C) planes never
    # exceed the per-block VMEM budget (protects v7x's 64 MiB VMEM).
    if C > 128 and L * C * 4 > budget:
        ctile = max(128, ((budget // (L * 4)) // 128) * 128)
    else:
        ctile = C
    nct = pl.cdiv(C, ctile)

    row_bytes = L * ctile * 4
    btile = _pick_batch_tile(B, row_bytes, budget)
    grid = (pl.cdiv(B, btile), nct)

    # Default double buffering is enough here; pipeline_mode=pl.Buffered(3)
    # could be added if v7x-constrained tiles ever leave DMA exposed.
    return pl.pallas_call(
        functools.partial(_freqnorm_kernel_3d, eps=eps),
        out_shape=jax.ShapeDtypeStruct((B, L, C), x.dtype),
        grid=grid,
        in_specs=[pl.BlockSpec((btile, L, ctile), lambda b, c: (b, 0, c))],
        out_specs=pl.BlockSpec((btile, L, ctile), lambda b, c: (b, 0, c)),
        compiler_params=pltpu.CompilerParams(
            dimension_semantics=("parallel", "parallel"),
            vmem_limit_bytes=vmem_limit,
        ),
    )(x)


def frequency_normalization(x, eps=1e-5, block_budget_bytes=None):
    """Pallas TPU implementation of FrequencyNormalization.forward (real input)."""
    if x.ndim != 3:
        raise ValueError("expected x of shape (B, L, C)")
    B, L, C = x.shape
    budget, vmem_limit = _vmem_budgets()
    if block_budget_bytes is not None:
        budget = int(block_budget_bytes)
    eps = float(eps)   # compile-time constant, no captured tracers
    if _use_flat_path(B, L, C, budget):
        return _forward_flat(x, eps, budget, vmem_limit)
    return _forward_3d(x, eps, budget, vmem_limit)


# ---------------------------------------------------------------------------
# Reference + demo
# ---------------------------------------------------------------------------

def _reference(x, eps=1e-5):
    """Pure-JAX reference mirroring the PyTorch forward (FFT path)."""
    freq_x = jnp.fft.fft(x, axis=1)
    mean = jnp.mean(freq_x, axis=1, keepdims=True)
    dev = freq_x - mean
    var = jnp.mean(jnp.abs(dev) ** 2, axis=1, keepdims=True)  # unbiased=False
    std = jnp.sqrt(var + eps)
    norm_freq_x = dev / std
    return jnp.fft.ifft(norm_freq_x, axis=1).real.astype(jnp.float32)


if __name__ == "__main__":
    key = jax.random.PRNGKey(0)
    cases = [
        ((2, 8, 16), None),        # lane-dense flattened path (C < 128)
        ((4, 16, 256), None),      # 3-D path, two batch grid steps
        ((2, 8, 512), 8 * 1024),   # tiny budget -> exercises C tiling (ctile=256)
    ]
    for shape, budget in cases:
        key, sub = jax.random.split(key)
        x = jax.random.normal(sub, shape, dtype=jnp.float32)
        out = jax.block_until_ready(
            frequency_normalization(x, eps=1e-5, block_budget_bytes=budget))
        ref = _reference(x, eps=1e-5)
        assert out.shape == shape and out.dtype == x.dtype
        assert jnp.allclose(out, ref, atol=2e-3, rtol=2e-3), f"mismatch at {shape}"
    print("KERNEL_OK")
</pallas_src>

<mosaic_0001>
module attributes {stable_mosaic.version = 11 : i64} {
  func.func @_freqnorm_kernel_flat(%arg0: i32, %arg1: memref<2x128xf32, #tpu.memory_space<vmem>>, %arg2: memref<128x16xf32, #tpu.memory_space<vmem>>, %arg3: memref<16x128xf32, #tpu.memory_space<vmem>>, %arg4: memref<2x128xf32, #tpu.memory_space<vmem>>) attributes {dimension_semantics = [#tpu.dimension_semantics<parallel>], iteration_bounds = array<i64: 1>, scalar_prefetch = 0 : i64, scratch_operands = 0 : i64, tpu.core_type = #tpu.core_type<tc>, window_params = [{transform_indices = @transform_0, window_bounds = array<i64: 2, 128>}, {pipeline_mode = #tpu.pipeline_mode<synchronous>, transform_indices = @transform_1, window_bounds = array<i64: 128, 16>}, {pipeline_mode = #tpu.pipeline_mode<synchronous>, transform_indices = @transform_2, window_bounds = array<i64: 16, 128>}, {transform_indices = @transform_3, window_bounds = array<i64: 2, 128>}]} {
    %c0 = arith.constant 0 : index
    %c0_0 = arith.constant 0 : index
    %0 = vector.load %arg1[%c0, %c0_0] : memref<2x128xf32, #tpu.memory_space<vmem>>, vector<2x128xf32>
    %1 = arith.mulf %0, %0 : vector<2x128xf32>
    %c0_1 = arith.constant 0 : index
    %c0_2 = arith.constant 0 : index
    %2 = vector.load %arg2[%c0_1, %c0_2] : memref<128x16xf32, #tpu.memory_space<vmem>>, vector<128x16xf32>
    %cst = arith.constant dense<0.000000e+00> : vector<2x16xf32>
    %3 = tpu.matmul %1, %2, %cst {dimension_numbers = #tpu.dot_dimension_numbers<[1], [0], [0], [1], [0, 0, 1, 1], [], []>, precision = #tpu.contract_precision<fp32>} : vector<2x128xf32>, vector<128x16xf32>, vector<2x16xf32> -> vector<2x16xf32>
    %cst_3 = arith.constant 9.99999974E-6 : f32
    %4 = vector.broadcast %cst_3 : f32 to vector<2x16xf32>
    %5 = arith.addf %3, %4 : vector<2x16xf32>
    %6 = math.rsqrt %5 : vector<2x16xf32>
    %c0_4 = arith.constant 0 : index
    %c0_5 = arith.constant 0 : index
    %7 = vector.load %arg3[%c0_4, %c0_5] : memref<16x128xf32, #tpu.memory_space<vmem>>, vector<16x128xf32>
    %cst_6 = arith.constant dense<0.000000e+00> : vector<2x128xf32>
    %8 = tpu.matmul %6, %7, %cst_6 {dimension_numbers = #tpu.dot_dimension_numbers<[1], [0], [0], [1], [0, 0, 1, 1], [], []>, precision = #tpu.contract_precision<fp32>} : vector<2x16xf32>, vector<16x128xf32>, vector<2x128xf32> -> vector<2x128xf32>
    %9 = arith.mulf %0, %8 : vector<2x128xf32>
    %c0_7 = arith.constant 0 : index
    %c0_8 = arith.constant 0 : index
    %10 = vector.load %arg4[%c0_7, %c0_8] : memref<2x128xf32, #tpu.memory_space<vmem>>, vector<2x128xf32>
    tpu.vector_store %arg4[%c0_7, %c0_8], %9 {strides = array<i32>} : memref<2x128xf32, #tpu.memory_space<vmem>>, vector<2x128xf32>,
    return
  }
  func.func @transform_0(%arg0: i32) -> (i32, i32) {
    %c0_i32 = arith.constant 0 : i32
    %c0_i32_0 = arith.constant 0 : i32
    return %arg0, %c0_i32 : i32, i32
  }
  func.func @transform_1(%arg0: i32) -> (i32, i32) {
    %c0_i32 = arith.constant 0 : i32
    %c0_i32_0 = arith.constant 0 : i32
    %c0_i32_1 = arith.constant 0 : i32
    return %c0_i32, %c0_i32_0 : i32, i32
  }
  func.func @transform_2(%arg0: i32) -> (i32, i32) {
    %c0_i32 = arith.constant 0 : i32
    %c0_i32_0 = arith.constant 0 : i32
    %c0_i32_1 = arith.constant 0 : i32
    return %c0_i32, %c0_i32_0 : i32, i32
  }
  func.func @transform_3(%arg0: i32) -> (i32, i32) {
    %c0_i32 = arith.constant 0 : i32
    %c0_i32_0 = arith.constant 0 : i32
    return %arg0, %c0_i32 : i32, i32
  }
}

</mosaic_0001>

<llo_original>
// kernel: tpu_custom_call.1
$region0: #{tpu_custom_call.1}
  #allocation0 [shape = 'u32[]', space=smem, size = 0x4, offset = 0x4, fixed_abs, tag = 'smem constant byte address 0x4 - core index']
  #allocation1 [shape = 'u32[144,128]{1,0:T(1,128)}', space=vmem, size = 0x12000, scoped, tag = 'internal scratch']
  %s0 = inlined_call_operand.vmem [shape: f32[2,128], index: 0, kind: input, shape index: {}]
  %s1 = inlined_call_operand.vmem [shape: f32[128,16], index: 1, kind: input, shape index: {}]
  %s2 = inlined_call_operand.vmem [shape: f32[16,128], index: 2, kind: input, shape index: {}]
  %s3 = inlined_call_operand.hbm [shape: f32[2,128], index: 3, kind: output, shape index: {}]
  %s4 = sld [smem:[#allocation0]]
  $region22: #{tpu_custom_call.1} parent=0
    _
  %s6 = ssub.s32 1, %s4
  %s7 = scalar_select 0, %s6, %s4
  $region1: #{tpu_custom_call.1} parent=0
    #allocation2 [shape = 'u8[1024]{0}', space=vmem, size = 0x400, scoped, tag = 'output window, operand 0, single buffered']
    #allocation3 [shape = 's32[1]{0}', space=sflag, size = 0x4, scoped, tag = 'scoped memory for tpu_custom_call.1']
    %8 = vsyncpa [#allocation3], 0
    // Predicated region
    $region2: #{tpu_custom_call.1} parent=1 // pred_check
      _
    $region3: #{tpu_custom_call.1} parent=1 // pred_check_branch
      %10 = sbr.rel (0) target = $region5
    $region4: #{tpu_custom_call.1} parent=1 // pred_region
      _
    $region5: #{tpu_custom_call.1} parent=1 // pred_fallthru
      _
    // Predicated region
    $region6: #{tpu_custom_call.1} parent=1 // pred_check
      _
    $region7: #{tpu_custom_call.1} parent=1 // pred_check_branch
      %12 = sbr.rel (0) target = $region9
    $region8: #{tpu_custom_call.1} parent=1 // pred_region
      _
    $region9: #{tpu_custom_call.1} parent=1 // pred_fallthru
      _
    // Predicated region
    $region10: #{tpu_custom_call.1} parent=1 // pred_check
      _
    $region11: #{tpu_custom_call.1} parent=1 // pred_check_branch
      %14 = sbr.rel (0) target = $region13
    $region12: #{tpu_custom_call.1} parent=1 // pred_region
      _
    $region13: #{tpu_custom_call.1} parent=1 // pred_fallthru
      _
    %v15 = vld [vmem:[%s0] sm:$0x3]
    %v16 = vmul.f32 %v15, %v15
    %v17 = vld [vmem:[%s1] sm:$0xff]
    %v18 = vld [vmem:[%s1 + $0x8] sm:$0xff]
    %v19 = vld [vmem:[%s1 + $0x10] sm:$0xff]
    %v20 = vld [vmem:[%s1 + $0x18] sm:$0xff]
    %v21 = vld [vmem:[%s1 + $0x20] sm:$0xff]
    %v22 = vld [vmem:[%s1 + $0x28] sm:$0xff]
    %v23 = vld [vmem:[%s1 + $0x30] sm:$0xff]
    %v24 = vld [vmem:[%s1 + $0x38] sm:$0xff]
    %v25 = vld [vmem:[%s1 + $0x40] sm:$0xff]
    %v26 = vld [vmem:[%s1 + $0x48] sm:$0xff]
    %v27 = vld [vmem:[%s1 + $0x50] sm:$0xff]
    %v28 = vld [vmem:[%s1 + $0x58] sm:$0xff]
    %v29 = vld [vmem:[%s1 + $0x60] sm:$0xff]
    %v30 = vld [vmem:[%s1 + $0x68] sm:$0xff]
    %v31 = vld [vmem:[%s1 + $0x70] sm:$0xff]
    %v32 = vld [vmem:[%s1 + $0x78] sm:$0xff]
    %33 = vmatprep.subr.mxu0 0.0
    %v34 = vand.u32 %v17, 4294901760
    %35 = vmatpush1.msra.mxu0 %v34
    %36 = vmatprep.subr.mxu0 0.0
    %v37 = vand.u32 %v18, 4294901760
    %38 = vmatpush1.msra.mxu0 %v37
    %39 = vmatprep.subr.mxu0 0.0
    %v40 = vand.u32 %v19, 4294901760
    %41 = vmatpush1.msra.mxu0 %v40
    %42 = vmatprep.subr.mxu0 0.0
    %v43 = vand.u32 %v20, 4294901760
    %44 = vmatpush1.msra.mxu0 %v43
    %45 = vmatprep.subr.mxu0 0.0
    %v46 = vand.u32 %v21, 4294901760
    %47 = vmatpush1.msra.mxu0 %v46
    %48 = vmatprep.subr.mxu0 0.0
    %v49 = vand.u32 %v22, 4294901760
    %50 = vmatpush1.msra.mxu0 %v49
    %51 = vmatprep.subr.mxu0 0.0
    %v52 = vand.u32 %v23, 4294901760
    %53 = vmatpush1.msra.mxu0 %v52
    %54 = vmatprep.subr.mxu0 0.0
    %v55 = vand.u32 %v24, 4294901760
    %56 = vmatpush1.msra.mxu0 %v55
    %57 = vmatprep.subr.mxu0 0.0
    %v58 = vand.u32 %v25, 4294901760
    %59 = vmatpush1.msra.mxu0 %v58
    %60 = vmatprep.subr.mxu0 0.0
    %v61 = vand.u32 %v26, 4294901760
    %62 = vmatpush1.msra.mxu0 %v61
    %63 = vmatprep.subr.mxu0 0.0
    %v64 = vand.u32 %v27, 4294901760
    %65 = vmatpush1.msra.mxu0 %v64
    %66 = vmatprep.subr.mxu0 0.0
    %v67 = vand.u32 %v28, 4294901760
    %68 = vmatpush1.msra.mxu0 %v67
    %69 = vmatprep.subr.mxu0 0.0
    %v70 = vand.u32 %v29, 4294901760
    %71 = vmatpush1.msra.mxu0 %v70
    %72 = vmatprep.subr.mxu0 0.0
    %v73 = vand.u32 %v30, 4294901760
    %74 = vmatpush1.msra.mxu0 %v73
    %75 = vmatprep.subr.mxu0 0.0
    %v76 = vand.u32 %v31, 4294901760
    %77 = vmatpush1.msra.mxu0 %v76
    %78 = vmatprep.subr.mxu0 0.0
    %v79 = vand.u32 %v32, 4294901760
    %80 = vmatpush1.msra.mxu0 %v79
    %81 = vmatprep.subr.mxu0 0.0
    %82 = vmatpush1.msra.mxu0 0.0
    %83 = vmatprep.subr.mxu0 0.0
    %84 = vmatpush1.msra.mxu0 0.0
    %85 = vmatprep.subr.mxu0 0.0
    %86 = vmatpush1.msra.mxu0 0.0
    %87 = vmatprep.subr.mxu0 0.0
    %88 = vmatpush1.msra.mxu0 0.0
    %89 = vmatprep.subr.mxu0 0.0
    %90 = vmatpush1.msra.mxu0 0.0
    %91 = vmatprep.subr.mxu0 0.0
    %92 = vmatpush1.msra.mxu0 0.0
    %93 = vmatprep.subr.mxu0 0.0
    %94 = vmatpush1.msra.mxu0 0.0
    %95 = vmatprep.subr.mxu0 0.0
    %96 = vmatpush1.msra.mxu0 0.0
    %97 = vmatprep.subr.mxu0 0.0
    %98 = vmatpush1.msra.mxu0 0.0
    %99 = vmatprep.subr.mxu0 0.0
    %100 = vmatpush1.msra.mxu0 0.0
    %101 = vmatprep.subr.mxu0 0.0
    %102 = vmatpush1.msra.mxu0 0.0
    %103 = vmatprep.subr.mxu0 0.0
    %104 = vmatpush1.msra.mxu0 0.0
    %105 = vmatprep.subr.mxu0 0.0
    %106 = vmatpush1.msra.mxu0 0.0
    %107 = vmatprep.subr.mxu0 0.0
    %108 = vmatpush1.msra.mxu0 0.0
    %109 = vmatprep.subr.mxu0 0.0
    %110 = vmatpush1.msra.mxu0 0.0
    %111 = vmatprep.subr.mxu0 0.0
    %112 = vmatpush1.msra.mxu0 0.0
    %113 = vmatprep.mubr.f32.mxu0 0.0
    %v114 = vand.u32 %v16, 4294901760
    %v115 = vsub.f32 %v16, %v114
    %v116 = vand.u32 %v115, 4294901760
    %v117 = vsub.f32 %v115, %v116
    %v118 = vand.u32 %v117, 4294901760
    %119 = vmatmul.mubr.f32.gmra.mrb[0].mxu0 %v118
    %v120 = vpop.f32.mrb[0].mxu0
    %v121 = vadd.f32 1e-05, %v120
    %v122 = vpop.f32.mrb[0].mxu0
    %123 = vdwg.mxu0
    %124 = vmatprep.subr.mxu0 0.0
    %v125 = vand.u32 %v17, 4294901760
    %v126 = vsub.f32 %v17, %v125
    %v127 = vand.u32 %v126, 4294901760
    %v128 = vsub.f32 %v126, %v127
    %v129 = vand.u32 %v128, 4294901760
    %130 = vmatpush1.msra.mxu0 %v129
    %131 = vmatprep.subr.mxu0 0.0
    %v132 = vand.u32 %v18, 4294901760
    %v133 = vsub.f32 %v18, %v132
    %v134 = vand.u32 %v133, 4294901760
    %v135 = vsub.f32 %v133, %v134
    %v136 = vand.u32 %v135, 4294901760
    %137 = vmatpush1.msra.mxu0 %v136
    %138 = vmatprep.subr.mxu0 0.0
    %v139 = vand.u32 %v19, 4294901760
    %v140 = vsub.f32 %v19, %v139
    %v141 = vand.u32 %v140, 4294901760
    %v142 = vsub.f32 %v140, %v141
    %v143 = vand.u32 %v142, 4294901760
    %144 = vmatpush1.msra.mxu0 %v143
    %145 = vmatprep.subr.mxu0 0.0
    %v146 = vand.u32 %v20, 4294901760
    %v147 = vsub.f32 %v20, %v146
    %v148 = vand.u32 %v147, 4294901760
    %v149 = vsub.f32 %v147, %v148
    %v150 = vand.u32 %v149, 4294901760
    %151 = vmatpush1.msra.mxu0 %v150
    %152 = vmatprep.subr.mxu0 0.0
    %v153 = vand.u32 %v21, 4294901760
    %v154 = vsub.f32 %v21, %v153
    %v155 = vand.u32 %v154, 4294901760
    %v156 = vsub.f32 %v154, %v155
    %v157 = vand.u32 %v156, 4294901760
    %158 = vmatpush1.msra.mxu0 %v157
    %159 = vmatprep.subr.mxu0 0.0
    %v160 = vand.u32 %v22, 4294901760
    %v161 = vsub.f32 %v22, %v160
    %v162 = vand.u32 %v161, 4294901760
    %v163 = vsub.f32 %v161, %v162
    %v164 = vand.u32 %v163, 4294901760
    %165 = vmatpush1.msra.mxu0 %v164
    %166 = vmatprep.subr.mxu0 0.0
    %v167 = vand.u32 %v23, 4294901760
    %v168 = vsub.f32 %v23, %v167
    %v169 = vand.u32 %v168, 4294901760
    %v170 = vsub.f32 %v168, %v169
    %v171 = vand.u32 %v170, 4294901760
    %172 = vmatpush1.msra.mxu0 %v171
    %173 = vmatprep.subr.mxu0 0.0
    %v174 = vand.u32 %v24, 4294901760
    %v175 = vsub.f32 %v24, %v174
    %v176 = vand.u32 %v175, 4294901760
    %v177 = vsub.f32 %v175, %v176
    %v178 = vand.u32 %v177, 4294901760
    %179 = vmatpush1.msra.mxu0 %v178
    %180 = vmatprep.subr.mxu0 0.0
    %v181 = vand.u32 %v25, 4294901760
    %v182 = vsub.f32 %v25, %v181
    %v183 = vand.u32 %v182, 4294901760
    %v184 = vsub.f32 %v182, %v183
    %v185 = vand.u32 %v184, 4294901760
    %186 = vmatpush1.msra.mxu0 %v185
    %187 = vmatprep.subr.mxu0 0.0
    %v188 = vand.u32 %v26, 4294901760
    %v189 = vsub.f32 %v26, %v188
    %v190 = vand.u32 %v189, 4294901760
    %v191 = vsub.f32 %v189, %v190
    %v192 = vand.u32 %v191, 4294901760
    %193 = vmatpush1.msra.mxu0 %v192
    %194 = vmatprep.subr.mxu0 0.0
    %v195 = vand.u32 %v27, 4294901760
    %v196 = vsub.f32 %v27, %v195
    %v197 = vand.u32 %v196, 4294901760
    %v198 = vsub.f32 %v196, %v197
    %v199 = vand.u32 %v198, 4294901760
    %200 = vmatpush1.msra.mxu0 %v199
    %201 = vmatprep.subr.mxu0 0.0
    %v202 = vand.u32 %v28, 4294901760
    %v203 = vsub.f32 %v28, %v202
    %v204 = vand.u32 %v203, 4294901760
    %v205 = vsub.f32 %v203, %v204
    %v206 = vand.u32 %v205, 4294901760
    %207 = vmatpush1.msra.mxu0 %v206
    %208 = vmatprep.subr.mxu0 0.0
    %v209 = vand.u32 %v29, 4294901760
    %v210 = vsub.f32 %v29, %v209
    %v211 = vand.u32 %v210, 4294901760
    %v212 = vsub.f32 %v210, %v211
    %v213 = vand.u32 %v212, 4294901760
    %214 = vmatpush1.msra.mxu0 %v213
    %215 = vmatprep.subr.mxu0 0.0
    %v216 = vand.u32 %v30, 4294901760
    %v217 = vsub.f32 %v30, %v216
    %v218 = vand.u32 %v217, 4294901760
    %v219 = vsub.f32 %v217, %v218
    %v220 = vand.u32 %v219, 4294901760
    %221 = vmatpush1.msra.mxu0 %v220
    %222 = vmatprep.subr.mxu0 0.0
    %v223 = vand.u32 %v31, 4294901760
    %v224 = vsub.f32 %v31, %v223
    %v225 = vand.u32 %v224, 4294901760
    %v226 = vsub.f32 %v224, %v225
    %v227 = vand.u32 %v226, 4294901760
    %228 = vmatpush1.msra.mxu0 %v227
    %229 = vmatprep.subr.mxu0 0.0
    %v230 = vand.u32 %v32, 4294901760
    %v231 = vsub.f32 %v32, %v230
    %v232 = vand.u32 %v231, 4294901760
    %v233 = vsub.f32 %v231, %v232
    %v234 = vand.u32 %v233, 4294901760
    %235 = vmatpush1.msra.mxu0 %v234
    %236 = vmatprep.subr.mxu0 0.0
    %237 = vmatpush1.msra.mxu0 0.0
    %238 = vmatprep.subr.mxu0 0.0
    %239 = vmatpush1.msra.mxu0 0.0
    %240 = vmatprep.subr.mxu0 0.0
    %241 = vmatpush1.msra.mxu0 0.0
    %242 = vmatprep.subr.mxu0 0.0
    %243 = vmatpush1.msra.mxu0 0.0
    %244 = vmatprep.subr.mxu0 0.0
    %245 = vmatpush1.msra.mxu0 0.0
    %246 = vmatprep.subr.mxu0 0.0
    %247 = vmatpush1.msra.mxu0 0.0
    %248 = vmatprep.subr.mxu0 0.0
    %249 = vmatpush1.msra.mxu0 0.0
    %250 = vmatprep.subr.mxu0 0.0
    %251 = vmatpush1.msra.mxu0 0.0
    %252 = vmatprep.subr.mxu0 0.0
    %253 = vmatpush1.msra.mxu0 0.0
    %254 = vmatprep.subr.mxu0 0.0
    %255 = vmatpush1.msra.mxu0 0.0
    %256 = vmatprep.subr.mxu0 0.0
    %257 = vmatpush1.msra.mxu0 0.0
    %258 = vmatprep.subr.mxu0 0.0
    %259 = vmatpush1.msra.mxu0 0.0
    %260 = vmatprep.subr.mxu0 0.0
    %261 = vmatpush1.msra.mxu0 0.0
    %262 = vmatprep.subr.mxu0 0.0
    %263 = vmatpush1.msra.mxu0 0.0
    %264 = vmatprep.subr.mxu0 0.0
    %265 = vmatpush1.msra.mxu0 0.0
    %266 = vmatprep.subr.mxu0 0.0
    %267 = vmatpush1.msra.mxu0 0.0
    %268 = vmatprep.mubr.f32.mxu0 0.0
    %v269 = vand.u32 %v16, 4294901760
    %270 = vmatmul.mubr.f32.gmra.mrb[0].mxu0 %v269
    %v271 = vpop.f32.mrb[0].mxu0
    %v272 = vadd.f32 %v121, %v271
    %v273 = vpop.f32.mrb[0].mxu0
    %274 = vdwg.mxu0
    %275 = vmatprep.subr.mxu0 0.0
    %v276 = vand.u32 %v17, 4294901760
    %v277 = vsub.f32 %v17, %v276
    %278 = vmatpush1.msra.mxu0 %v277
    %279 = vmatprep.subr.mxu0 0.0
    %v280 = vand.u32 %v18, 4294901760
    %v281 = vsub.f32 %v18, %v280
    %282 = vmatpush1.msra.mxu0 %v281
    %283 = vmatprep.subr.mxu0 0.0
    %v284 = vand.u32 %v19, 4294901760
    %v285 = vsub.f32 %v19, %v284
    %286 = vmatpush1.msra.mxu0 %v285
    %287 = vmatprep.subr.mxu0 0.0
    %v288 = vand.u32 %v20, 4294901760
    %v289 = vsub.f32 %v20, %v288
    %290 = vmatpush1.msra.mxu0 %v289
    %291 = vmatprep.subr.mxu0 0.0
    %v292 = vand.u32 %v21, 4294901760
    %v293 = vsub.f32 %v21, %v292
    %294 = vmatpush1.msra.mxu0 %v293
    %295 = vmatprep.subr.mxu0 0.0
    %v296 = vand.u32 %v22, 4294901760
    %v297 = vsub.f32 %v22, %v296
    %298 = vmatpush1.msra.mxu0 %v297
    %299 = vmatprep.subr.mxu0 0.0
    %v300 = vand.u32 %v23, 4294901760
    %v301 = vsub.f32 %v23, %v300
    %302 = vmatpush1.msra.mxu0 %v301
    %303 = vmatprep.subr.mxu0 0.0
    %v304 = vand.u32 %v24, 4294901760
    %v305 = vsub.f32 %v24, %v304
    %306 = vmatpush1.msra.mxu0 %v305
    %307 = vmatprep.subr.mxu0 0.0
    %v308 = vand.u32 %v25, 4294901760
    %v309 = vsub.f32 %v25, %v308
    %310 = vmatpush1.msra.mxu0 %v309
    %311 = vmatprep.subr.mxu0 0.0
    %v312 = vand.u32 %v26, 4294901760
    %v313 = vsub.f32 %v26, %v312
    %314 = vmatpush1.msra.mxu0 %v313
    %315 = vmatprep.subr.mxu0 0.0
    %v316 = vand.u32 %v27, 4294901760
    %v317 = vsub.f32 %v27, %v316
    %318 = vmatpush1.msra.mxu0 %v317
    %319 = vmatprep.subr.mxu0 0.0
    %v320 = vand.u32 %v28, 4294901760
    %v321 = vsub.f32 %v28, %v320
    %322 = vmatpush1.msra.mxu0 %v321
    %323 = vmatprep.subr.mxu0 0.0
    %v324 = vand.u32 %v29, 4294901760
    %v325 = vsub.f32 %v29, %v324
    %326 = vmatpush1.msra.mxu0 %v325
    %327 = vmatprep.subr.mxu0 0.0
    %v328 = vand.u32 %v30, 4294901760
    %v329 = vsub.f32 %v30, %v328
    %330 = vmatpush1.msra.mxu0 %v329
    %331 = vmatprep.subr.mxu0 0.0
    %v332 = vand.u32 %v31, 4294901760
    %v333 = vsub.f32 %v31, %v332
    %334 = vmatpush1.msra.mxu0 %v333
    %335 = vmatprep.subr.mxu0 0.0
    %v336 = vand.u32 %v32, 4294901760
    %v337 = vsub.f32 %v32, %v336
    %338 = vmatpush1.msra.mxu0 %v337
    %339 = vmatprep.subr.mxu0 0.0
    %340 = vmatpush1.msra.mxu0 0.0
    %341 = vmatprep.subr.mxu0 0.0
    %342 = vmatpush1.msra.mxu0 0.0
    %343 = vmatprep.subr.mxu0 0.0
    %344 = vmatpush1.msra.mxu0 0.0
    %345 = vmatprep.subr.mxu0 0.0
    %346 = vmatpush1.msra.mxu0 0.0
    %347 = vmatprep.subr.mxu0 0.0
    %348 = vmatpush1.msra.mxu0 0.0
    %349 = vmatprep.subr.mxu0 0.0
    %350 = vmatpush1.msra.mxu0 0.0
    %351 = vmatprep.subr.mxu0 0.0
    %352 = vmatpush1.msra.mxu0 0.0
    %353 = vmatprep.subr.mxu0 0.0
    %354 = vmatpush1.msra.mxu0 0.0
    %355 = vmatprep.subr.mxu0 0.0
    %356 = vmatpush1.msra.mxu0 0.0
    %357 = vmatprep.subr.mxu0 0.0
    %358 = vmatpush1.msra.mxu0 0.0
    %359 = vmatprep.subr.mxu0 0.0
    %360 = vmatpush1.msra.mxu0 0.0
    %361 = vmatprep.subr.mxu0 0.0
    %362 = vmatpush1.msra.mxu0 0.0
    %363 = vmatprep.subr.mxu0 0.0
    %364 = vmatpush1.msra.mxu0 0.0
    %365 = vmatprep.subr.mxu0 0.0
    %366 = vmatpush1.msra.mxu0 0.0
    %367 = vmatprep.subr.mxu0 0.0
    %368 = vmatpush1.msra.mxu0 0.0
    %369 = vmatprep.subr.mxu0 0.0
    %370 = vmatpush1.msra.mxu0 0.0
    %371 = vmatprep.mubr.f32.mxu0 0.0
    %v372 = vand.u32 %v16, 4294901760
    %v373 = vsub.f32 %v16, %v372
    %374 = vmatmul.mubr.f32.gmra.mrb[0].mxu0 %v373
    %v375 = vpop.f32.mrb[0].mxu0
    %v376 = vadd.f32 %v272, %v375
    %v377 = vpop.f32.mrb[0].mxu0
    %378 = vdwg.mxu0
    %379 = vmatprep.subr.mxu0 0.0
    %v380 = vand.u32 %v17, 4294901760
    %381 = vmatpush1.msra.mxu0 %v380
    %382 = vmatprep.subr.mxu0 0.0
    %v383 = vand.u32 %v18, 4294901760
    %384 = vmatpush1.msra.mxu0 %v383
    %385 = vmatprep.subr.mxu0 0.0
    %v386 = vand.u32 %v19, 4294901760
    %387 = vmatpush1.msra.mxu0 %v386
    %388 = vmatprep.subr.mxu0 0.0
    %v389 = vand.u32 %v20, 4294901760
    %390 = vmatpush1.msra.mxu0 %v389
    %391 = vmatprep.subr.mxu0 0.0
    %v392 = vand.u32 %v21, 4294901760
    %393 = vmatpush1.msra.mxu0 %v392
    %394 = vmatprep.subr.mxu0 0.0
    %v395 = vand.u32 %v22, 4294901760
    %396 = vmatpush1.msra.mxu0 %v395
    %397 = vmatprep.subr.mxu0 0.0
    %v398 = vand.u32 %v23, 4294901760
    %399 = vmatpush1.msra.mxu0 %v398
    %400 = vmatprep.subr.mxu0 0.0
    %v401 = vand.u32 %v24, 4294901760
    %402 = vmatpush1.msra.mxu0 %v401
    %403 = vmatprep.subr.mxu0 0.0
    %v404 = vand.u32 %v25, 4294901760
    %405 = vmatpush1.msra.mxu0 %v404
    %406 = vmatprep.subr.mxu0 0.0
    %v407 = vand.u32 %v26, 4294901760
    %408 = vmatpush1.msra.mxu0 %v407
    %409 = vmatprep.subr.mxu0 0.0
    %v410 = vand.u32 %v27, 4294901760
    %411 = vmatpush1.msra.mxu0 %v410
    %412 = vmatprep.subr.mxu0 0.0
    %v413 = vand.u32 %v28, 4294901760
    %414 = vmatpush1.msra.mxu0 %v413
    %415 = vmatprep.subr.mxu0 0.0
    %v416 = vand.u32 %v29, 4294901760
    %417 = vmatpush1.msra.mxu0 %v416
    %418 = vmatprep.subr.mxu0 0.0
    %v419 = vand.u32 %v30, 4294901760
    %420 = vmatpush1.msra.mxu0 %v419
    %421 = vmatprep.subr.mxu0 0.0
    %v422 = vand.u32 %v31, 4294901760
    %423 = vmatpush1.msra.mxu0 %v422
    %424 = vmatprep.subr.mxu0 0.0
    %v425 = vand.u32 %v32, 4294901760
    %426 = vmatpush1.msra.mxu0 %v425
    %427 = vmatprep.subr.mxu0 0.0
    %428 = vmatpush1.msra.mxu0 0.0
    %429 = vmatprep.subr.mxu0 0.0
    %430 = vmatpush1.msra.mxu0 0.0
    %431 = vmatprep.subr.mxu0 0.0
    %432 = vmatpush1.msra.mxu0 0.0
    %433 = vmatprep.subr.mxu0 0.0
    %434 = vmatpush1.msra.mxu0 0.0
    %435 = vmatprep.subr.mxu0 0.0
    %436 = vmatpush1.msra.mxu0 0.0
    %437 = vmatprep.subr.mxu0 0.0
    %438 = vmatpush1.msra.mxu0 0.0
    %439 = vmatprep.subr.mxu0 0.0
    %440 = vmatpush1.msra.mxu0 0.0
    %441 = vmatprep.subr.mxu0 0.0
    %442 = vmatpush1.msra.mxu0 0.0
    %443 = vmatprep.subr.mxu0 0.0
    %444 = vmatpush1.msra.mxu0 0.0
    %445 = vmatprep.subr.mxu0 0.0
    %446 = vmatpush1.msra.mxu0 0.0
    %447 = vmatprep.subr.mxu0 0.0
    %448 = vmatpush1.msra.mxu0 0.0
    %449 = vmatprep.subr.mxu0 0.0
    %450 = vmatpush1.msra.mxu0 0.0
    %451 = vmatprep.subr.mxu0 0.0
    %452 = vmatpush1.msra.mxu0 0.0
    %453 = vmatprep.subr.mxu0 0.0
    %454 = vmatpush1.msra.mxu0 0.0
    %455 = vmatprep.subr.mxu0 0.0
    %456 = vmatpush1.msra.mxu0 0.0
    %457 = vmatprep.subr.mxu0 0.0
    %458 = vmatpush1.msra.mxu0 0.0
    %459 = vmatprep.mubr.f32.mxu0 0.0
    %v460 = vand.u32 %v16, 4294901760
    %v461 = vsub.f32 %v16, %v460
    %v462 = vand.u32 %v461, 4294901760
    %463 = vmatmul.mubr.f32.gmra.mrb[0].mxu0 %v462
    %v464 = vpop.f32.mrb[0].mxu0
    %v465 = vadd.f32 %v376, %v464
    %v466 = vpop.f32.mrb[0].mxu0
    %467 = vdwg.mxu0
    %468 = vmatprep.subr.mxu0 0.0
    %v469 = vand.u32 %v17, 4294901760
    %v470 = vsub.f32 %v17, %v469
    %v471 = vand.u32 %v470, 4294901760
    %472 = vmatpush1.msra.mxu0 %v471
    %473 = vmatprep.subr.mxu0 0.0
    %v474 = vand.u32 %v18, 4294901760
    %v475 = vsub.f32 %v18, %v474
    %v476 = vand.u32 %v475, 4294901760
    %477 = vmatpush1.msra.mxu0 %v476
    %478 = vmatprep.subr.mxu0 0.0
    %v479 = vand.u32 %v19, 4294901760
    %v480 = vsub.f32 %v19, %v479
    %v481 = vand.u32 %v480, 4294901760
    %482 = vmatpush1.msra.mxu0 %v481
    %483 = vmatprep.subr.mxu0 0.0
    %v484 = vand.u32 %v20, 4294901760
    %v485 = vsub.f32 %v20, %v484
    %v486 = vand.u32 %v485, 4294901760
    %487 = vmatpush1.msra.mxu0 %v486
    %488 = vmatprep.subr.mxu0 0.0
    %v489 = vand.u32 %v21, 4294901760
    %v490 = vsub.f32 %v21, %v489
    %v491 = vand.u32 %v490, 4294901760
    %492 = vmatpush1.msra.mxu0 %v491
    %493 = vmatprep.subr.mxu0 0.0
    %v494 = vand.u32 %v22, 4294901760
    %v495 = vsub.f32 %v22, %v494
    %v496 = vand.u32 %v495, 4294901760
    %497 = vmatpush1.msra.mxu0 %v496
    %498 = vmatprep.subr.mxu0 0.0
    %v499 = vand.u32 %v23, 4294901760
    %v500 = vsub.f32 %v23, %v499
    %v501 = vand.u32 %v500, 4294901760
    %502 = vmatpush1.msra.mxu0 %v501
    %503 = vmatprep.subr.mxu0 0.0
    %v504 = vand.u32 %v24, 4294901760
    %v505 = vsub.f32 %v24, %v504
    %v506 = vand.u32 %v505, 4294901760
    %507 = vmatpush1.msra.mxu0 %v506
    %508 = vmatprep.subr.mxu0 0.0
    %v509 = vand.u32 %v25, 4294901760
    %v510 = vsub.f32 %v25, %v509
    %v511 = vand.u32 %v510, 4294901760
    %512 = vmatpush1.msra.mxu0 %v511
    %513 = vmatprep.subr.mxu0 0.0
    %v514 = vand.u32 %v26, 4294901760
    %v515 = vsub.f32 %v26, %v514
    %v516 = vand.u32 %v515, 4294901760
    %517 = vmatpush1.msra.mxu0 %v516
    %518 = vmatprep.subr.mxu0 0.0
    %v519 = vand.u32 %v27, 4294901760
    %v520 = vsub.f32 %v27, %v519
    %v521 = vand.u32 %v520, 4294901760
    %522 = vmatpush1.msra.mxu0 %v521
    %523 = vmatprep.subr.mxu0 0.0
    %v524 = vand.u32 %v28, 4294901760
    %v525 = vsub.f32 %v28, %v524
    %v526 = vand.u32 %v525, 4294901760
    %527 = vmatpush1.msra.mxu0 %v526
    %528 = vmatprep.subr.mxu0 0.0
    %v529 = vand.u32 %v29, 4294901760
    %v530 = vsub.f32 %v29, %v529
    %v531 = vand.u32 %v530, 4294901760
    %532 = vmatpush1.msra.mxu0 %v531
    %533 = vmatprep.subr.mxu0 0.0
    %v534 = vand.u32 %v30, 4294901760
    %v535 = vsub.f32 %v30, %v534
    %v536 = vand.u32 %v535, 4294901760
    %537 = vmatpush1.msra.mxu0 %v536
    %538 = vmatprep.subr.mxu0 0.0
    %v539 = vand.u32 %v31, 4294901760
    %v540 = vsub.f32 %v31, %v539
    %v541 = vand.u32 %v540, 4294901760
    %542 = vmatpush1.msra.mxu0 %v541
    %543 = vmatprep.subr.mxu0 0.0
    %v544 = vand.u32 %v32, 4294901760
    %v545 = vsub.f32 %v32, %v544
    %v546 = vand.u32 %v545, 4294901760
    %547 = vmatpush1.msra.mxu0 %v546
    %548 = vmatprep.subr.mxu0 0.0
    %549 = vmatpush1.msra.mxu0 0.0
    %550 = vmatprep.subr.mxu0 0.0
    %551 = vmatpush1.msra.mxu0 0.0
    %552 = vmatprep.subr.mxu0 0.0
    %553 = vmatpush1.msra.mxu0 0.0
    %554 = vmatprep.subr.mxu0 0.0
    %555 = vmatpush1.msra.mxu0 0.0
    %556 = vmatprep.subr.mxu0 0.0
    %557 = vmatpush1.msra.mxu0 0.0
    %558 = vmatprep.subr.mxu0 0.0
    %559 = vmatpush1.msra.mxu0 0.0
    %560 = vmatprep.subr.mxu0 0.0
    %561 = vmatpush1.msra.mxu0 0.0
    %562 = vmatprep.subr.mxu0 0.0
    %563 = vmatpush1.msra.mxu0 0.0
    %564 = vmatprep.subr.mxu0 0.0
    %565 = vmatpush1.msra.mxu0 0.0
    %566 = vmatprep.subr.mxu0 0.0
    %567 = vmatpush1.msra.mxu0 0.0
    %568 = vmatprep.subr.mxu0 0.0
    %569 = vmatpush1.msra.mxu0 0.0
    %570 = vmatprep.subr.mxu0 0.0
    %571 = vmatpush1.msra.mxu0 0.0
    %572 = vmatprep.subr.mxu0 0.0
    %573 = vmatpush1.msra.mxu0 0.0
    %574 = vmatprep.subr.mxu0 0.0
    %575 = vmatpush1.msra.mxu0 0.0
    %576 = vmatprep.subr.mxu0 0.0
    %577 = vmatpush1.msra.mxu0 0.0
    %578 = vmatprep.subr.mxu0 0.0
    %579 = vmatpush1.msra.mxu0 0.0
    %580 = vmatprep.mubr.f32.mxu0 0.0
    %v581 = vand.u32 %v16, 4294901760
    %582 = vmatmul.mubr.f32.gmra.mrb[0].mxu0 %v581
    %v583 = vpop.f32.mrb[0].mxu0
    %v584 = vadd.f32 %v465, %v583
    %v585 = vpop.f32.mrb[0].mxu0
    %586 = vdwg.mxu0
    %587 = vmatprep.subr.mxu0 0.0
    %v588 = vand.u32 %v17, 4294901760
    %589 = vmatpush1.msra.mxu0 %v588
    %590 = vmatprep.subr.mxu0 0.0
    %v591 = vand.u32 %v18, 4294901760
    %592 = vmatpush1.msra.mxu0 %v591
    %593 = vmatprep.subr.mxu0 0.0
    %v594 = vand.u32 %v19, 4294901760
    %595 = vmatpush1.msra.mxu0 %v594
    %596 = vmatprep.subr.mxu0 0.0
    %v597 = vand.u32 %v20, 4294901760
    %598 = vmatpush1.msra.mxu0 %v597
    %599 = vmatprep.subr.mxu0 0.0
    %v600 = vand.u32 %v21, 4294901760
    %601 = vmatpush1.msra.mxu0 %v600
    %602 = vmatprep.subr.mxu0 0.0
    %v603 = vand.u32 %v22, 4294901760
    %604 = vmatpush1.msra.mxu0 %v603
    %605 = vmatprep.subr.mxu0 0.0
    %v606 = vand.u32 %v23, 4294901760
    %607 = vmatpush1.msra.mxu0 %v606
    %608 = vmatprep.subr.mxu0 0.0
    %v609 = vand.u32 %v24, 4294901760
    %610 = vmatpush1.msra.mxu0 %v609
    %611 = vmatprep.subr.mxu0 0.0
    %v612 = vand.u32 %v25, 4294901760
    %613 = vmatpush1.msra.mxu0 %v612
    %614 = vmatprep.subr.mxu0 0.0
    %v615 = vand.u32 %v26, 4294901760
    %616 = vmatpush1.msra.mxu0 %v615
    %617 = vmatprep.subr.mxu0 0.0
    %v618 = vand.u32 %v27, 4294901760
    %619 = vmatpush1.msra.mxu0 %v618
    %620 = vmatprep.subr.mxu0 0.0
    %v621 = vand.u32 %v28, 4294901760
    %622 = vmatpush1.msra.mxu0 %v621
    %623 = vmatprep.subr.mxu0 0.0
    %v624 = vand.u32 %v29, 4294901760
    %625 = vmatpush1.msra.mxu0 %v624
    %626 = vmatprep.subr.mxu0 0.0
    %v627 = vand.u32 %v30, 4294901760
    %628 = vmatpush1.msra.mxu0 %v627
    %629 = vmatprep.subr.mxu0 0.0
    %v630 = vand.u32 %v31, 4294901760
    %631 = vmatpush1.msra.mxu0 %v630
    %632 = vmatprep.subr.mxu0 0.0
    %v633 = vand.u32 %v32, 4294901760
    %634 = vmatpush1.msra.mxu0 %v633
    %635 = vmatprep.subr.mxu0 0.0
    %636 = vmatpush1.msra.mxu0 0.0
    %637 = vmatprep.subr.mxu0 0.0
    %638 = vmatpush1.msra.mxu0 0.0
    %639 = vmatprep.subr.mxu0 0.0
    %640 = vmatpush1.msra.mxu0 0.0
    %641 = vmatprep.subr.mxu0 0.0
    %642 = vmatpush1.msra.mxu0 0.0
    %643 = vmatprep.subr.mxu0 0.0
    %644 = vmatpush1.msra.mxu0 0.0
    %645 = vmatprep.subr.mxu0 0.0
    %646 = vmatpush1.msra.mxu0 0.0
    %647 = vmatprep.subr.mxu0 0.0
    %648 = vmatpush1.msra.mxu0 0.0
    %649 = vmatprep.subr.mxu0 0.0
    %650 = vmatpush1.msra.mxu0 0.0
    %651 = vmatprep.subr.mxu0 0.0
    %652 = vmatpush1.msra.mxu0 0.0
    %653 = vmatprep.subr.mxu0 0.0
    %654 = vmatpush1.msra.mxu0 0.0
    %655 = vmatprep.subr.mxu0 0.0
    %656 = vmatpush1.msra.mxu0 0.0
    %657 = vmatprep.subr.mxu0 0.0
    %658 = vmatpush1.msra.mxu0 0.0
    %659 = vmatprep.subr.mxu0 0.0
    %660 = vmatpush1.msra.mxu0 0.0
    %661 = vmatprep.subr.mxu0 0.0
    %662 = vmatpush1.msra.mxu0 0.0
    %663 = vmatprep.subr.mxu0 0.0
    %664 = vmatpush1.msra.mxu0 0.0
    %665 = vmatprep.subr.mxu0 0.0
    %666 = vmatpush1.msra.mxu0 0.0
    %667 = vmatprep.mubr.f32.mxu0 0.0
    %v668 = vand.u32 %v16, 4294901760
    %669 = vmatmul.mubr.f32.gmra.mrb[0].mxu0 %v668
    %v670 = vpop.f32.mrb[0].mxu0
    %v671 = vadd.f32 %v584, %v670
    %v672 = vpop.f32.mrb[0].mxu0
    %673 = vdwg.mxu0
    %v674 = vrsqrt.pop %v671
    %v675 = vld [vmem:[%s2] sm:$0xff]
    %v676 = vld [vmem:[%s2 + $0x8] sm:$0xff]
    %vm677 = vcmask 130048
    %v679 = vsel %vm677, %v674, 0
    %681 = vmatprep.subr.mxu0 0.0
    %v682 = vand.u32 %v675, 4294901760
    %683 = vmatpush1.msra.mxu0 %v682
    %684 = vmatprep.subr.mxu0 0.0
    %v685 = vand.u32 %v676, 4294901760
    %686 = vmatpush1.msra.mxu0 %v685
    %687 = vmatprep.subr.mxu0 0.0
    %688 = vmatpush1.msra.mxu0 0.0
    %689 = vmatprep.subr.mxu0 0.0
    %690 = vmatpush1.msra.mxu0 0.0
    %691 = vmatprep.subr.mxu0 0.0
    %692 = vmatpush1.msra.mxu0 0.0
    %693 = vmatprep.subr.mxu0 0.0
    %694 = vmatpush1.msra.mxu0 0.0
    %695 = vmatprep.subr.mxu0 0.0
    %696 = vmatpush1.msra.mxu0 0.0
    %697 = vmatprep.subr.mxu0 0.0
    %698 = vmatpush1.msra.mxu0 0.0
    %699 = vmatprep.subr.mxu0 0.0
    %700 = vmatpush1.msra.mxu0 0.0
    %701 = vmatprep.subr.mxu0 0.0
    %702 = vmatpush1.msra.mxu0 0.0
    %703 = vmatprep.subr.mxu0 0.0
    %704 = vmatpush1.msra.mxu0 0.0
    %705 = vmatprep.subr.mxu0 0.0
    %706 = vmatpush1.msra.mxu0 0.0
    %707 = vmatprep.subr.mxu0 0.0
    %708 = vmatpush1.msra.mxu0 0.0
    %709 = vmatprep.subr.mxu0 0.0
    %710 = vmatpush1.msra.mxu0 0.0
    %711 = vmatprep.subr.mxu0 0.0
    %712 = vmatpush1.msra.mxu0 0.0
    %713 = vmatprep.subr.mxu0 0.0
    %714 = vmatpush1.msra.mxu0 0.0
    %715 = vmatprep.subr.mxu0 0.0
    %716 = vmatpush1.msra.mxu0 0.0
    %717 = vmatprep.subr.mxu0 0.0
    %718 = vmatpush1.msra.mxu0 0.0
    %719 = vmatprep.subr.mxu0 0.0
    %720 = vmatpush1.msra.mxu0 0.0
    %721 = vmatprep.subr.mxu0 0.0
    %722 = vmatpush1.msra.mxu0 0.0
    %723 = vmatprep.subr.mxu0 0.0
    %724 = vmatpush1.msra.mxu0 0.0
    %725 = vmatprep.subr.mxu0 0.0
    %726 = vmatpush1.msra.mxu0 0.0
    %727 = vmatprep.subr.mxu0 0.0
    %728 = vmatpush1.msra.mxu0 0.0
    %729 = vmatprep.subr.mxu0 0.0
    %730 = vmatpush1.msra.mxu0 0.0
    %731 = vmatprep.subr.mxu0 0.0
    %732 = vmatpush1.msra.mxu0 0.0
    %733 = vmatprep.subr.mxu0 0.0
    %734 = vmatpush1.msra.mxu0 0.0
    %735 = vmatprep.subr.mxu0 0.0
    %736 = vmatpush1.msra.mxu0 0.0
    %737 = vmatprep.subr.mxu0 0.0
    %738 = vmatpush1.msra.mxu0 0.0
    %739 = vmatprep.subr.mxu0 0.0
    %740 = vmatpush1.msra.mxu0 0.0
    %741 = vmatprep.subr.mxu0 0.0
    %742 = vmatpush1.msra.mxu0 0.0
    %743 = vmatprep.subr.mxu0 0.0
    %744 = vmatpush1.msra.mxu0 0.0
    %745 = vmatprep.subr.mxu0 0.0
    %746 = vmatpush1.msra.mxu0 0.0
    %747 = vmatprep.mubr.f32.mxu0 0.0
    %v748 = vand.u32 %v679, 4294901760
    %v749 = vsub.f32 %v679, %v748
    %v750 = vand.u32 %v749, 4294901760
    %v751 = vsub.f32 %v749, %v750
    %v752 = vand.u32 %v751, 4294901760
    %753 = vmatmul.mubr.f32.gmra.mrb[0].mxu0 %v752
    %v754 = vpop.f32.mrb[0].mxu0
    %v755 = vadd.f32 0.0, %v754
    %v756 = vpop.f32.mrb[0].mxu0
    %757 = vdwg.mxu0
    %758 = vmatprep.subr.mxu0 0.0
    %v759 = vand.u32 %v675, 4294901760
    %v760 = vsub.f32 %v675, %v759
    %v761 = vand.u32 %v760, 4294901760
    %v762 = vsub.f32 %v760, %v761
    %v763 = vand.u32 %v762, 4294901760
    %764 = vmatpush1.msra.mxu0 %v763
    %765 = vmatprep.subr.mxu0 0.0
    %v766 = vand.u32 %v676, 4294901760
    %v767 = vsub.f32 %v676, %v766
    %v768 = vand.u32 %v767, 4294901760
    %v769 = vsub.f32 %v767, %v768
    %v770 = vand.u32 %v769, 4294901760
    %771 = vmatpush1.msra.mxu0 %v770
    %772 = vmatprep.subr.mxu0 0.0
    %773 = vmatpush1.msra.mxu0 0.0
    %774 = vmatprep.subr.mxu0 0.0
    %775 = vmatpush1.msra.mxu0 0.0
    %776 = vmatprep.subr.mxu0 0.0
    %777 = vmatpush1.msra.mxu0 0.0
    %778 = vmatprep.subr.mxu0 0.0
    %779 = vmatpush1.msra.mxu0 0.0
    %780 = vmatprep.subr.mxu0 0.0
    %781 = vmatpush1.msra.mxu0 0.0
    %782 = vmatprep.subr.mxu0 0.0
    %783 = vmatpush1.msra.mxu0 0.0
    %784 = vmatprep.subr.mxu0 0.0
    %785 = vmatpush1.msra.mxu0 0.0
    %786 = vmatprep.subr.mxu0 0.0
    %787 = vmatpush1.msra.mxu0 0.0
    %788 = vmatprep.subr.mxu0 0.0
    %789 = vmatpush1.msra.mxu0 0.0
    %790 = vmatprep.subr.mxu0 0.0
    %791 = vmatpush1.msra.mxu0 0.0
    %792 = vmatprep.subr.mxu0 0.0
    %793 = vmatpush1.msra.mxu0 0.0
    %794 = vmatprep.subr.mxu0 0.0
    %795 = vmatpush1.msra.mxu0 0.0
    %796 = vmatprep.subr.mxu0 0.0
    %797 = vmatpush1.msra.mxu0 0.0
    %798 = vmatprep.subr.mxu0 0.0
    %799 = vmatpush1.msra.mxu0 0.0
    %800 = vmatprep.subr.mxu0 0.0
    %801 = vmatpush1.msra.mxu0 0.0
    %802 = vmatprep.subr.mxu0 0.0
    %803 = vmatpush1.msra.mxu0 0.0
    %804 = vmatprep.subr.mxu0 0.0
    %805 = vmatpush1.msra.mxu0 0.0
    %806 = vmatprep.subr.mxu0 0.0
    %807 = vmatpush1.msra.mxu0 0.0
    %808 = vmatprep.subr.mxu0 0.0
    %809 = vmatpush1.msra.mxu0 0.0
    %810 = vmatprep.subr.mxu0 0.0
    %811 = vmatpush1.msra.mxu0 0.0
    %812 = vmatprep.subr.mxu0 0.0
    %813 = vmatpush1.msra.mxu0 0.0
    %814 = vmatprep.subr.mxu0 0.0
    %815 = vmatpush1.msra.mxu0 0.0
    %816 = vmatprep.subr.mxu0 0.0
    %817 = vmatpush1.msra.mxu0 0.0
    %818 = vmatprep.subr.mxu0 0.0
    %819 = vmatpush1.msra.mxu0 0.0
    %820 = vmatprep.subr.mxu0 0.0
    %821 = vmatpush1.msra.mxu0 0.0
    %822 = vmatprep.subr.mxu0 0.0
    %823 = vmatpush1.msra.mxu0 0.0
    %824 = vmatprep.subr.mxu0 0.0
    %825 = vmatpush1.msra.mxu0 0.0
    %826 = vmatprep.subr.mxu0 0.0
    %827 = vmatpush1.msra.mxu0 0.0
    %828 = vmatprep.subr.mxu0 0.0
    %829 = vmatpush1.msra.mxu0 0.0
    %830 = vmatprep.subr.mxu0 0.0
    %831 = vmatpush1.msra.mxu0 0.0
    %832 = vmatprep.mubr.f32.mxu0 0.0
    %v833 = vand.u32 %v679, 4294901760
    %834 = vmatmul.mubr.f32.gmra.mrb[0].mxu0 %v833
    %v835 = vpop.f32.mrb[0].mxu0
    %v836 = vadd.f32 %v755, %v835
    %v837 = vpop.f32.mrb[0].mxu0
    %838 = vdwg.mxu0
    %839 = vmatprep.subr.mxu0 0.0
    %v840 = vand.u32 %v675, 4294901760
    %v841 = vsub.f32 %v675, %v840
    %842 = vmatpush1.msra.mxu0 %v841
    %843 = vmatprep.subr.mxu0 0.0
    %v844 = vand.u32 %v676, 4294901760
    %v845 = vsub.f32 %v676, %v844
    %846 = vmatpush1.msra.mxu0 %v845
    %847 = vmatprep.subr.mxu0 0.0
    %848 = vmatpush1.msra.mxu0 0.0
    %849 = vmatprep.subr.mxu0 0.0
    %850 = vmatpush1.msra.mxu0 0.0
    %851 = vmatprep.subr.mxu0 0.0
    %852 = vmatpush1.msra.mxu0 0.0
    %853 = vmatprep.subr.mxu0 0.0
    %854 = vmatpush1.msra.mxu0 0.0
    %855 = vmatprep.subr.mxu0 0.0
    %856 = vmatpush1.msra.mxu0 0.0
    %857 = vmatprep.subr.mxu0 0.0
    %858 = vmatpush1.msra.mxu0 0.0
    %859 = vmatprep.subr.mxu0 0.0
    %860 = vmatpush1.msra.mxu0 0.0
    %861 = vmatprep.subr.mxu0 0.0
    %862 = vmatpush1.msra.mxu0 0.0
    %863 = vmatprep.subr.mxu0 0.0
    %864 = vmatpush1.msra.mxu0 0.0
    %865 = vmatprep.subr.mxu0 0.0
    %866 = vmatpush1.msra.mxu0 0.0
    %867 = vmatprep.subr.mxu0 0.0
    %868 = vmatpush1.msra.mxu0 0.0
    %869 = vmatprep.subr.mxu0 0.0
    %870 = vmatpush1.msra.mxu0 0.0
    %871 = vmatprep.subr.mxu0 0.0
    %872 = vmatpush1.msra.mxu0 0.0
    %873 = vmatprep.subr.mxu0 0.0
    %874 = vmatpush1.msra.mxu0 0.0
    %875 = vmatprep.subr.mxu0 0.0
    %876 = vmatpush1.msra.mxu0 0.0
    %877 = vmatprep.subr.mxu0 0.0
    %878 = vmatpush1.msra.mxu0 0.0
    %879 = vmatprep.subr.mxu0 0.0
    %880 = vmatpush1.msra.mxu0 0.0
    %881 = vmatprep.subr.mxu0 0.0
    %882 = vmatpush1.msra.mxu0 0.0
    %883 = vmatprep.subr.mxu0 0.0
    %884 = vmatpush1.msra.mxu0 0.0
    %885 = vmatprep.subr.mxu0 0.0
    %886 = vmatpush1.msra.mxu0 0.0
    %887 = vmatprep.subr.mxu0 0.0
    %888 = vmatpush1.msra.mxu0 0.0
    %889 = vmatprep.subr.mxu0 0.0
    %890 = vmatpush1.msra.mxu0 0.0
    %891 = vmatprep.subr.mxu0 0.0
    %892 = vmatpush1.msra.mxu0 0.0
    %893 = vmatprep.subr.mxu0 0.0
    %894 = vmatpush1.msra.mxu0 0.0
    %895 = vmatprep.subr.mxu0 0.0
    %896 = vmatpush1.msra.mxu0 0.0
    %897 = vmatprep.subr.mxu0 0.0
    %898 = vmatpush1.msra.mxu0 0.0
    %899 = vmatprep.subr.mxu0 0.0
    %900 = vmatpush1.msra.mxu0 0.0
    %901 = vmatprep.subr.mxu0 0.0
    %902 = vmatpush1.msra.mxu0 0.0
    %903 = vmatprep.subr.mxu0 0.0
    %904 = vmatpush1.msra.mxu0 0.0
    %905 = vmatprep.subr.mxu0 0.0
    %906 = vmatpush1.msra.mxu0 0.0
    %907 = vmatprep.mubr.f32.mxu0 0.0
    %v908 = vand.u32 %v679, 4294901760
    %v909 = vsub.f32 %v679, %v908
    %910 = vmatmul.mubr.f32.gmra.mrb[0].mxu0 %v909
    %v911 = vpop.f32.mrb[0].mxu0
    %v912 = vadd.f32 %v836, %v911
    %v913 = vpop.f32.mrb[0].mxu0
    %914 = vdwg.mxu0
    %915 = vmatprep.subr.mxu0 0.0
    %v916 = vand.u32 %v675, 4294901760
    %917 = vmatpush1.msra.mxu0 %v916
    %918 = vmatprep.subr.mxu0 0.0
    %v919 = vand.u32 %v676, 4294901760
    %920 = vmatpush1.msra.mxu0 %v919
    %921 = vmatprep.subr.mxu0 0.0
    %922 = vmatpush1.msra.mxu0 0.0
    %923 = vmatprep.subr.mxu0 0.0
    %924 = vmatpush1.msra.mxu0 0.0
    %925 = vmatprep.subr.mxu0 0.0
    %926 = vmatpush1.msra.mxu0 0.0
    %927 = vmatprep.subr.mxu0 0.0
    %928 = vmatpush1.msra.mxu0 0.0
    %929 = vmatprep.subr.mxu0 0.0
    %930 = vmatpush1.msra.mxu0 0.0
    %931 = vmatprep.subr.mxu0 0.0
    %932 = vmatpush1.msra.mxu0 0.0
    %933 = vmatprep.subr.mxu0 0.0
    %934 = vmatpush1.msra.mxu0 0.0
    %935 = vmatprep.subr.mxu0 0.0
    %936 = vmatpush1.msra.mxu0 0.0
    %937 = vmatprep.subr.mxu0 0.0
    %938 = vmatpush1.msra.mxu0 0.0
    %939 = vmatprep.subr.mxu0 0.0
    %940 = vmatpush1.msra.mxu0 0.0
    %941 = vmatprep.subr.mxu0 0.0
    %942 = vmatpush1.msra.mxu0 0.0
    %943 = vmatprep.subr.mxu0 0.0
    %944 = vmatpush1.msra.mxu0 0.0
    %945 = vmatprep.subr.mxu0 0.0
    %946 = vmatpush1.msra.mxu0 0.0
    %947 = vmatprep.subr.mxu0 0.0
    %948 = vmatpush1.msra.mxu0 0.0
    %949 = vmatprep.subr.mxu0 0.0
    %950 = vmatpush1.msra.mxu0 0.0
    %951 = vmatprep.subr.mxu0 0.0
    %952 = vmatpush1.msra.mxu0 0.0
    %953 = vmatprep.subr.mxu0 0.0
    %954 = vmatpush1.msra.mxu0 0.0
    %955 = vmatprep.subr.mxu0 0.0
    %956 = vmatpush1.msra.mxu0 0.0
    %957 = vmatprep.subr.mxu0 0.0
    %958 = vmatpush1.msra.mxu0 0.0
    %959 = vmatprep.subr.mxu0 0.0
    %960 = vmatpush1.msra.mxu0 0.0
    %961 = vmatprep.subr.mxu0 0.0
    %962 = vmatpush1.msra.mxu0 0.0
    %963 = vmatprep.subr.mxu0 0.0
    %964 = vmatpush1.msra.mxu0 0.0
    %965 = vmatprep.subr.mxu0 0.0
    %966 = vmatpush1.msra.mxu0 0.0
    %967 = vmatprep.subr.mxu0 0.0
    %968 = vmatpush1.msra.mxu0 0.0
    %969 = vmatprep.subr.mxu0 0.0
    %970 = vmatpush1.msra.mxu0 0.0
    %971 = vmatprep.subr.mxu0 0.0
    %972 = vmatpush1.msra.mxu0 0.0
    %973 = vmatprep.subr.mxu0 0.0
    %974 = vmatpush1.msra.mxu0 0.0
    %975 = vmatprep.subr.mxu0 0.0
    %976 = vmatpush1.msra.mxu0 0.0
    %977 = vmatprep.subr.mxu0 0.0
    %978 = vmatpush1.msra.mxu0 0.0
    %979 = vmatprep.subr.mxu0 0.0
    %980 = vmatpush1.msra.mxu0 0.0
    %981 = vmatprep.mubr.f32.mxu0 0.0
    %v982 = vand.u32 %v679, 4294901760
    %v983 = vsub.f32 %v679, %v982
    %v984 = vand.u32 %v983, 4294901760
    %985 = vmatmul.mubr.f32.gmra.mrb[0].mxu0 %v984
    %v986 = vpop.f32.mrb[0].mxu0
    %v987 = vadd.f32 %v912, %v986
    %v988 = vpop.f32.mrb[0].mxu0
    %989 = vdwg.mxu0
    %990 = vmatprep.subr.mxu0 0.0
    %v991 = vand.u32 %v675, 4294901760
    %v992 = vsub.f32 %v675, %v991
    %v993 = vand.u32 %v992, 4294901760
    %994 = vmatpush1.msra.mxu0 %v993
    %995 = vmatprep.subr.mxu0 0.0
    %v996 = vand.u32 %v676, 4294901760
    %v997 = vsub.f32 %v676, %v996
    %v998 = vand.u32 %v997, 4294901760
    %999 = vmatpush1.msra.mxu0 %v998
    %1000 = vmatprep.subr.mxu0 0.0
    %1001 = vmatpush1.msra.mxu0 0.0
    %1002 = vmatprep.subr.mxu0 0.0
    %1003 = vmatpush1.msra.mxu0 0.0
    %1004 = vmatprep.subr.mxu0 0.0
    %1005 = vmatpush1.msra.mxu0 0.0
    %1006 = vmatprep.subr.mxu0 0.0
    %1007 = vmatpush1.msra.mxu0 0.0
    %1008 = vmatprep.subr.mxu0 0.0
    %1009 = vmatpush1.msra.mxu0 0.0
    %1010 = vmatprep.subr.mxu0 0.0
    %1011 = vmatpush1.msra.mxu0 0.0
    %1012 = vmatprep.subr.mxu0 0.0
    %1013 = vmatpush1.msra.mxu0 0.0
    %1014 = vmatprep.subr.mxu0 0.0
    %1015 = vmatpush1.msra.mxu0 0.0
    %1016 = vmatprep.subr.mxu0 0.0
    %1017 = vmatpush1.msra.mxu0 0.0
    %1018 = vmatprep.subr.mxu0 0.0
    %1019 = vmatpush1.msra.mxu0 0.0
    %1020 = vmatprep.subr.mxu0 0.0
    %1021 = vmatpush1.msra.mxu0 0.0
    %1022 = vmatprep.subr.mxu0 0.0
    %1023 = vmatpush1.msra.mxu0 0.0
    %1024 = vmatprep.subr.mxu0 0.0
    %1025 = vmatpush1.msra.mxu0 0.0
    %1026 = vmatprep.subr.mxu0 0.0
    %1027 = vmatpush1.msra.mxu0 0.0
    %1028 = vmatprep.subr.mxu0 0.0
    %1029 = vmatpush1.msra.mxu0 0.0
    %1030 = vmatprep.subr.mxu0 0.0
    %1031 = vmatpush1.msra.mxu0 0.0
    %1032 = vmatprep.subr.mxu0 0.0
    %1033 = vmatpush1.msra.mxu0 0.0
    %1034 = vmatprep.subr.mxu0 0.0
    %1035 = vmatpush1.msra.mxu0 0.0
    %1036 = vmatprep.subr.mxu0 0.0
    %1037 = vmatpush1.msra.mxu0 0.0
    %1038 = vmatprep.subr.mxu0 0.0
    %1039 = vmatpush1.msra.mxu0 0.0
    %1040 = vmatprep.subr.mxu0 0.0
    %1041 = vmatpush1.msra.mxu0 0.0
    %1042 = vmatprep.subr.mxu0 0.0
    %1043 = vmatpush1.msra.mxu0 0.0
    %1044 = vmatprep.subr.mxu0 0.0
    %1045 = vmatpush1.msra.mxu0 0.0
    %1046 = vmatprep.subr.mxu0 0.0
    %1047 = vmatpush1.msra.mxu0 0.0
    %1048 = vmatprep.subr.mxu0 0.0
    %1049 = vmatpush1.msra.mxu0 0.0
    %1050 = vmatprep.subr.mxu0 0.0
    %1051 = vmatpush1.msra.mxu0 0.0
    %1052 = vmatprep.subr.mxu0 0.0
    %1053 = vmatpush1.msra.mxu0 0.0
    %1054 = vmatprep.subr.mxu0 0.0
    %1055 = vmatpush1.msra.mxu0 0.0
    %1056 = vmatprep.subr.mxu0 0.0
    %1057 = vmatpush1.msra.mxu0 0.0
    %1058 = vmatprep.subr.mxu0 0.0
    %1059 = vmatpush1.msra.mxu0 0.0
    %1060 = vmatprep.mubr.f32.mxu0 0.0
    %v1061 = vand.u32 %v679, 4294901760
    %1062 = vmatmul.mubr.f32.gmra.mrb[0].mxu0 %v1061
    %v1063 = vpop.f32.mrb[0].mxu0
    %v1064 = vadd.f32 %v987, %v1063
    %v1065 = vpop.f32.mrb[0].mxu0
    %1066 = vdwg.mxu0
    %1067 = vmatprep.subr.mxu0 0.0
    %v1068 = vand.u32 %v675, 4294901760
    %1069 = vmatpush1.msra.mxu0 %v1068
    %1070 = vmatprep.subr.mxu0 0.0
    %v1071 = vand.u32 %v676, 4294901760
    %1072 = vmatpush1.msra.mxu0 %v1071
    %1073 = vmatprep.subr.mxu0 0.0
    %1074 = vmatpush1.msra.mxu0 0.0
    %1075 = vmatprep.subr.mxu0 0.0
    %1076 = vmatpush1.msra.mxu0 0.0
    %1077 = vmatprep.subr.mxu0 0.0
    %1078 = vmatpush1.msra.mxu0 0.0
    %1079 = vmatprep.subr.mxu0 0.0
    %1080 = vmatpush1.msra.mxu0 0.0
    %1081 = vmatprep.subr.mxu0 0.0
    %1082 = vmatpush1.msra.mxu0 0.0
    %1083 = vmatprep.subr.mxu0 0.0
    %1084 = vmatpush1.msra.mxu0 0.0
    %1085 = vmatprep.subr.mxu0 0.0
    %1086 = vmatpush1.msra.mxu0 0.0
    %1087 = vmatprep.subr.mxu0 0.0
    %1088 = vmatpush1.msra.mxu0 0.0
    %1089 = vmatprep.subr.mxu0 0.0
    %1090 = vmatpush1.msra.mxu0 0.0
    %1091 = vmatprep.subr.mxu0 0.0
    %1092 = vmatpush1.msra.mxu0 0.0
    %1093 = vmatprep.subr.mxu0 0.0
    %1094 = vmatpush1.msra.mxu0 0.0
    %1095 = vmatprep.subr.mxu0 0.0
    %1096 = vmatpush1.msra.mxu0 0.0
    %1097 = vmatprep.subr.mxu0 0.0
    %1098 = vmatpush1.msra.mxu0 0.0
    %1099 = vmatprep.subr.mxu0 0.0
    %1100 = vmatpush1.msra.mxu0 0.0
    %1101 = vmatprep.subr.mxu0 0.0
    %1102 = vmatpush1.msra.mxu0 0.0
    %1103 = vmatprep.subr.mxu0 0.0
    %1104 = vmatpush1.msra.mxu0 0.0
    %1105 = vmatprep.subr.mxu0 0.0
    %1106 = vmatpush1.msra.mxu0 0.0
    %1107 = vmatprep.subr.mxu0 0.0
    %1108 = vmatpush1.msra.mxu0 0.0
    %1109 = vmatprep.subr.mxu0 0.0
    %1110 = vmatpush1.msra.mxu0 0.0
    %1111 = vmatprep.subr.mxu0 0.0
    %1112 = vmatpush1.msra.mxu0 0.0
    %1113 = vmatprep.subr.mxu0 0.0
    %1114 = vmatpush1.msra.mxu0 0.0
    %1115 = vmatprep.subr.mxu0 0.0
    %1116 = vmatpush1.msra.mxu0 0.0
    %1117 = vmatprep.subr.mxu0 0.0
    %1118 = vmatpush1.msra.mxu0 0.0
    %1119 = vmatprep.subr.mxu0 0.0
    %1120 = vmatpush1.msra.mxu0 0.0
    %1121 = vmatprep.subr.mxu0 0.0
    %1122 = vmatpush1.msra.mxu0 0.0
    %1123 = vmatprep.subr.mxu0 0.0
    %1124 = vmatpush1.msra.mxu0 0.0
    %1125 = vmatprep.subr.mxu0 0.0
    %1126 = vmatpush1.msra.mxu0 0.0
    %1127 = vmatprep.subr.mxu0 0.0
    %1128 = vmatpush1.msra.mxu0 0.0
    %1129 = vmatprep.subr.mxu0 0.0
    %1130 = vmatpush1.msra.mxu0 0.0
    %1131 = vmatprep.subr.mxu0 0.0
    %1132 = vmatpush1.msra.mxu0 0.0
    %1133 = vmatprep.mubr.f32.mxu0 0.0
    %v1134 = vand.u32 %v679, 4294901760
    %1135 = vmatmul.mubr.f32.gmra.mrb[0].mxu0 %v1134
    %v1136 = vpop.f32.mrb[0].mxu0
    %v1137 = vadd.f32 %v1064, %v1136
    %v1138 = vpop.f32.mrb[0].mxu0
    %1139 = vdwg.mxu0
    %v1140 = vmul.f32 %v15, %v1137
    %1141 = vst [vmem:[#allocation2] sm:$0x3] %v1140
    // Predicated region
    $region14: #{tpu_custom_call.1} parent=1 // pred_check
      _
    $region15: #{tpu_custom_call.1} parent=1 // pred_check_branch
      %1143 = sbr.rel (0) target = $region17
    $region16: #{tpu_custom_call.1} parent=1 // pred_region
      %s1145 = ssub.s32 32, 32
      %1146 = vsyncadd [#allocation3], %s1145
      %s1148 = sshll.u32 [#allocation2], 4
      %s1149 = int_to_ptr.vmem [resolvable:$true] %s1148
      %1151 = dma.vmem_to_hbm [thread:$0]  %s1149, 32, %s3, [#allocation3]
    $region17: #{tpu_custom_call.1} parent=1 // pred_fallthru
      _
    // Predicated region
    $region18: #{tpu_custom_call.1} parent=1 // pred_check
      _
    $region19: #{tpu_custom_call.1} parent=1 // pred_check_branch
      %1153 = sbr.rel (0) target = $region21
    $region20: #{tpu_custom_call.1} parent=1 // pred_region
      %1154 = dma.done [#allocation3], 32
    $region21: #{tpu_custom_call.1} parent=1 // pred_fallthru
      _
    %1155 = vsyncpa [#allocation3], 1

</llo_original>
